<compile_context>
chip_gen: v7x
topology: tpu7x:2x2x1
jax: 0.10.0
libtpu: 0.0.40
codegen_flags: <defaults>
</compile_context>

<pallas_src>
import math
import functools

import jax
import jax.numpy as jnp
from jax import lax
from jax.experimental import pallas as pl
from jax.experimental.pallas import tpu as pltpu
import numpy as np


# ------------------------------ tiling helpers ------------------------------

def _pick_tile(dim, target, floor):
    """Largest power-of-two tile <= target (>= floor) that divides dim, else full dim."""
    t = target
    while t >= floor:
        if dim >= t and dim % t == 0:
            return t
        t //= 2
    return dim


# ------------------------- tiled linear (x @ W + b) --------------------------

def _linear_kernel(x_ref, w_ref, b_ref, o_ref, acc_ref):
    @pl.when(pl.program_id(2) == 0)
    def _():
        acc_ref[...] = jnp.zeros_like(acc_ref)

    acc_ref[...] += jnp.dot(x_ref[...], w_ref[...],
                            preferred_element_type=jnp.float32)

    @pl.when(pl.program_id(2) == pl.num_programs(2) - 1)
    def _():
        o_ref[...] = (acc_ref[...] + b_ref[...]).astype(o_ref.dtype)


def linear(x2d, w, b, tm_target=256, tn_target=256, tk_target=512):
    """x2d: (M, K), w: (K, N) (already transposed from PyTorch layout), b: (N,)."""
    m, k = x2d.shape
    _, n = w.shape
    tm = _pick_tile(m, tm_target, 128)
    tn = _pick_tile(n, tn_target, 128)
    tk = _pick_tile(k, tk_target, 128)
    grid = (m // tm, n // tn, k // tk)

    return pl.pallas_call(
        _linear_kernel,
        out_shape=jax.ShapeDtypeStruct((m, n), jnp.float32),
        grid_spec=pltpu.PrefetchScalarGridSpec(
            num_scalar_prefetch=0,
            grid=grid,
            in_specs=[
                pl.BlockSpec((tm, tk), lambda i, j, kk: (i, kk)),
                pl.BlockSpec((tk, tn), lambda i, j, kk: (kk, j)),
                pl.BlockSpec((1, tn), lambda i, j, kk: (0, j)),
            ],
            out_specs=pl.BlockSpec((tm, tn), lambda i, j, kk: (i, j)),
            scratch_shapes=[pltpu.VMEM((tm, tn), jnp.float32)],
        ),
        compiler_params=pltpu.CompilerParams(
            dimension_semantics=("parallel", "parallel", "arbitrary"),
            vmem_limit_bytes=64 * 1024 * 1024),
    )(x2d, w, b.reshape(1, n))


# ---------------- flash attention with ALiBi, all heads per step -------------

def _flash_attn_kernel(q_ref, k_ref, v_ref, o_ref, m_sc, l_sc, acc_sc, *,
                       nheads, head_dim, scale, tq, tk):
    ki = pl.program_id(2)

    @pl.when(ki == 0)
    def _():
        m_sc[...] = jnp.full_like(m_sc, -jnp.inf)
        l_sc[...] = jnp.zeros_like(l_sc)
        acc_sc[...] = jnp.zeros_like(acc_sc)

    # (T, H*Dh) -> (H, T, Dh): per-head layout for batched MXU matmuls.
    q = jnp.swapaxes(q_ref[0].reshape(tq, nheads, head_dim), 0, 1)
    k = jnp.swapaxes(k_ref[0].reshape(tk, nheads, head_dim), 0, 1)
    v = jnp.swapaxes(v_ref[0].reshape(tk, nheads, head_dim), 0, 1)

    # scores (H, Tq, Tk), scaled like sdpa/flex_attention before score_mod
    s = jnp.einsum("hqd,hkd->hqk", q, k,
                   preferred_element_type=jnp.float32) * scale

    # ALiBi score_mod: slope[h] * (kv_idx - q_idx); single per-tile diff from grid offsets
    q0 = (pl.program_id(1) * tq).astype(jnp.float32)
    k0 = (ki * tk).astype(jnp.float32)
    diff = ((k0 + lax.broadcasted_iota(jnp.float32, (tq, tk), 1))
            - (q0 + lax.broadcasted_iota(jnp.float32, (tq, tk), 0)))
    h_ids = lax.broadcasted_iota(jnp.float32, (nheads, 1), 0)
    slopes = jnp.exp2(-(h_ids + 1.0) * (8.0 / nheads))[:, :, None]   # (H, 1, 1)
    s = s + slopes * diff[None, :, :]

    # online softmax update
    m_prev = m_sc[...]
    m_new = jnp.maximum(m_prev, jnp.max(s, axis=-1, keepdims=True))
    alpha = jnp.exp(m_prev - m_new)
    p = jnp.exp(s - m_new)
    l_sc[...] = alpha * l_sc[...] + jnp.sum(p, axis=-1, keepdims=True)
    acc_sc[...] = alpha * acc_sc[...] + jnp.einsum(
        "hqk,hkd->hqd", p, v, preferred_element_type=jnp.float32)
    m_sc[...] = m_new

    @pl.when(ki == pl.num_programs(2) - 1)
    def _():
        out = acc_sc[...] * pl.reciprocal(l_sc[...], approx=True)     # (H, Tq, Dh)
        out = jnp.swapaxes(out, 0, 1).reshape(tq, nheads * head_dim)  # (Tq, H*Dh)
        o_ref[0] = out.astype(o_ref.dtype)


def flash_attention_packed(qkv, tot_dim, nheads, tq_target=256, tk_target=256):
    """qkv: (B, S, 3*tot_dim) packed activations -> (B, S, tot_dim) merged-head output."""
    bsz, seqlen, packed_dim = qkv.shape
    assert packed_dim == 3 * tot_dim
    head_dim = tot_dim // nheads
    tq = _pick_tile(seqlen, tq_target, 8)
    tk = _pick_tile(seqlen, tk_target, 8)
    scale = 1.0 / math.sqrt(head_dim)

    kernel = functools.partial(_flash_attn_kernel, nheads=nheads,
                               head_dim=head_dim, scale=scale, tq=tq, tk=tk)

    if tot_dim % 128 == 0:
        # Read Q/K/V column slices straight out of the packed QKV array (no HBM split):
        # lane-dense blocks of width tot_dim at last-dim block indices 0 / 1 / 2.
        q_in = k_in = v_in = qkv
        q_spec = pl.BlockSpec((1, tq, tot_dim), lambda b, qi, ki: (b, qi, 0))
        k_spec = pl.BlockSpec((1, tk, tot_dim), lambda b, qi, ki: (b, ki, 1))
        v_spec = pl.BlockSpec((1, tk, tot_dim), lambda b, qi, ki: (b, ki, 2))
    else:
        # Fallback for lane-sparse tot_dim: materialize contiguous Q/K/V so each block's
        # trailing dim equals the full array dim (satisfies the (8,128) rule).
        q_in, k_in, v_in = jnp.split(qkv, 3, axis=-1)
        q_spec = pl.BlockSpec((1, tq, tot_dim), lambda b, qi, ki: (b, qi, 0))
        k_spec = pl.BlockSpec((1, tk, tot_dim), lambda b, qi, ki: (b, ki, 0))
        v_spec = pl.BlockSpec((1, tk, tot_dim), lambda b, qi, ki: (b, ki, 0))

    return pl.pallas_call(
        kernel,
        out_shape=jax.ShapeDtypeStruct((bsz, seqlen, tot_dim), jnp.float32),
        grid_spec=pltpu.PrefetchScalarGridSpec(
            num_scalar_prefetch=0,
            grid=(bsz, seqlen // tq, seqlen // tk),
            in_specs=[q_spec, k_spec, v_spec],
            out_specs=pl.BlockSpec((1, tq, tot_dim), lambda b, qi, ki: (b, qi, 0)),
            scratch_shapes=[
                pltpu.VMEM((nheads, tq, 1), jnp.float32),          # running max m
                pltpu.VMEM((nheads, tq, 1), jnp.float32),          # running denom l
                pltpu.VMEM((nheads, tq, head_dim), jnp.float32),   # output accumulator
            ],
        ),
        compiler_params=pltpu.CompilerParams(
            dimension_semantics=("parallel", "parallel", "arbitrary"),
            vmem_limit_bytes=64 * 1024 * 1024),
    )(q_in, k_in, v_in)


# --------------------------- module-level wrapper ----------------------------

class MultiHeadAttentionPallas:
    def __init__(self, q_dim, k_dim, v_dim, tot_dim, nheads, bias=True, key=None):
        assert tot_dim % nheads == 0
        assert q_dim == k_dim == v_dim, "kernel implements the qkv_samedim path"
        assert bias, "kernel implements the bias=True path"
        self.nheads = nheads
        self.tot_dim = tot_dim
        self.head_dim = tot_dim // nheads
        self.residual_dim = q_dim

        key = key if key is not None else jax.random.PRNGKey(0)
        k1, k2, k3, k4 = jax.random.split(key, 4)
        # PyTorch nn.Linear weight layout: (out_features, in_features)
        self.packed_w = 0.05 * jax.random.normal(k1, (3 * tot_dim, q_dim), jnp.float32)
        self.packed_b = 0.05 * jax.random.normal(k2, (3 * tot_dim,), jnp.float32)
        self.out_w = 0.05 * jax.random.normal(k3, (q_dim, tot_dim), jnp.float32)
        self.out_b = 0.05 * jax.random.normal(k4, (q_dim,), jnp.float32)
        # pre-transposed copies so no per-call transpose op / HBM pass
        self.packed_w_t = jnp.asarray(self.packed_w.T)   # (q_dim, 3*tot_dim)
        self.out_w_t = jnp.asarray(self.out_w.T)         # (tot_dim, q_dim)

    def __call__(self, query_input, key_input, value_input):
        # self-attention path (query is key is value): single packed projection
        bsz, seqlen, _ = query_input.shape
        x2d = query_input.reshape(bsz * seqlen, self.residual_dim)

        qkv = linear(x2d, self.packed_w_t, self.packed_b)          # (B*S, 3*tot)
        qkv = qkv.reshape(bsz, seqlen, 3 * self.tot_dim)

        # flash attention consumes the packed QKV directly and emits merged heads
        attn = flash_attention_packed(qkv, self.tot_dim, self.nheads)  # (B, S, tot)

        out = linear(attn.reshape(bsz * seqlen, self.tot_dim),
                     self.out_w_t, self.out_b)                      # (B*S, Qdim)
        return out.reshape(bsz, seqlen, self.residual_dim)


# -------------------------------- pure-JAX ref --------------------------------

def reference(mha, x):
    bsz, seqlen, _ = x.shape
    qkv = x @ mha.packed_w.T + mha.packed_b
    q, k, v = jnp.split(qkv, 3, axis=-1)

    def split_heads(t):
        return t.reshape(bsz, seqlen, mha.nheads, mha.head_dim).transpose(0, 2, 1, 3)

    q, k, v = split_heads(q), split_heads(k), split_heads(v)
    slopes = jnp.exp2(-(jnp.arange(1, mha.nheads + 1, dtype=jnp.float32)) * 8.0 / mha.nheads)
    s = jnp.einsum("bhqd,bhkd->bhqk", q, k) / math.sqrt(mha.head_dim)
    pos = (jnp.arange(seqlen, dtype=jnp.float32)[None, :]
           - jnp.arange(seqlen, dtype=jnp.float32)[:, None])
    s = s + slopes[None, :, None, None] * pos[None, None]
    p = jax.nn.softmax(s, axis=-1)
    o = jnp.einsum("bhqk,bhkd->bhqd", p, v)
    o = o.transpose(0, 2, 1, 3).reshape(bsz, seqlen, mha.tot_dim)
    return o @ mha.out_w.T + mha.out_b


# ------------------------------------ main ------------------------------------

if __name__ == "__main__":
    # small but lane-dense shapes: tot_dim = 128 so packed-QKV column blocks are 128-wide
    B, S = 2, 8
    q_dim = k_dim = v_dim = 128
    tot_dim = 128
    nheads = 4

    root = jax.random.PRNGKey(0)
    kx, kp = jax.random.split(root)
    x = jax.random.normal(kx, (B, S, q_dim), jnp.float32)

    mha = MultiHeadAttentionPallas(q_dim, k_dim, v_dim, tot_dim, nheads, bias=True, key=kp)

    out = mha(x, x, x)          # self-attention: query is key is value
    out = jax.block_until_ready(out)

    ref = reference(mha, x)
    # all math is f32; the only sub-f32-accuracy op is the EUP approx reciprocal in the
    # softmax finalize, hence the slightly relaxed tolerance.
    np.testing.assert_allclose(np.asarray(out), np.asarray(ref), rtol=5e-3, atol=5e-3)

    print("KERNEL_OK")
</pallas_src>

<mosaic_0001>
module attributes {stable_mosaic.version = 11 : i64} {
  func.func @_linear_kernel(%arg0: i32, %arg1: i32, %arg2: i32, %arg3: memref<16x128xf32, #tpu.memory_space<vmem>>, %arg4: memref<128x128xf32, #tpu.memory_space<vmem>>, %arg5: memref<1x128xf32, #tpu.memory_space<vmem>>, %arg6: memref<16x128xf32, #tpu.memory_space<vmem>>, %arg7: memref<16x128xf32, #tpu.memory_space<vmem>>) attributes {dimension_semantics = [#tpu.dimension_semantics<parallel>, #tpu.dimension_semantics<parallel>, #tpu.dimension_semantics<arbitrary>], iteration_bounds = array<i64: 1, 3, 1>, scalar_prefetch = 0 : i64, scratch_operands = 1 : i64, tpu.core_type = #tpu.core_type<tc>, window_params = [{transform_indices = @transform_0, window_bounds = array<i64: 16, 128>}, {transform_indices = @transform_1, window_bounds = array<i64: 128, 128>}, {transform_indices = @transform_2, window_bounds = array<i64: 1, 128>}, {transform_indices = @transform_3, window_bounds = array<i64: 16, 128>}]} {
    %c0_i32 = arith.constant 0 : i32
    %0 = arith.cmpi eq, %arg2, %c0_i32 : i32
    %1 = arith.extui %0 : i1 to i32
    %c0_i32_0 = arith.constant 0 : i32
    %2 = arith.cmpi ne, %1, %c0_i32_0 : i32
    scf.if %2 {
      %cst_10 = arith.constant 0.000000e+00 : f32
      %12 = vector.broadcast %cst_10 : f32 to vector<16x128xf32>
      %c0_11 = arith.constant 0 : index
      %c0_12 = arith.constant 0 : index
      %13 = vector.load %arg7[%c0_11, %c0_12] : memref<16x128xf32, #tpu.memory_space<vmem>>, vector<16x128xf32>
      tpu.vector_store %arg7[%c0_11, %c0_12], %12 {strides = array<i32>} : memref<16x128xf32, #tpu.memory_space<vmem>>, vector<16x128xf32>,
    } else {
    }
    %c0 = arith.constant 0 : index
    %c0_1 = arith.constant 0 : index
    %3 = vector.load %arg7[%c0, %c0_1] : memref<16x128xf32, #tpu.memory_space<vmem>>, vector<16x128xf32>
    %c0_2 = arith.constant 0 : index
    %c0_3 = arith.constant 0 : index
    %4 = vector.load %arg3[%c0_2, %c0_3] : memref<16x128xf32, #tpu.memory_space<vmem>>, vector<16x128xf32>
    %c0_4 = arith.constant 0 : index
    %c0_5 = arith.constant 0 : index
    %5 = vector.load %arg4[%c0_4, %c0_5] : memref<128x128xf32, #tpu.memory_space<vmem>>, vector<128x128xf32>
    %cst = arith.constant dense<0.000000e+00> : vector<16x128xf32>
    %6 = tpu.matmul %4, %5, %cst {dimension_numbers = #tpu.dot_dimension_numbers<[1], [0], [0], [1], [0, 0, 1, 1], [], []>} : vector<16x128xf32>, vector<128x128xf32>, vector<16x128xf32> -> vector<16x128xf32>
    %7 = arith.addf %3, %6 : vector<16x128xf32>
    %c0_6 = arith.constant 0 : index
    %c0_7 = arith.constant 0 : index
    %8 = vector.load %arg7[%c0_6, %c0_7] : memref<16x128xf32, #tpu.memory_space<vmem>>, vector<16x128xf32>
    tpu.vector_store %arg7[%c0_6, %c0_7], %7 {strides = array<i32>} : memref<16x128xf32, #tpu.memory_space<vmem>>, vector<16x128xf32>,
    %c0_i32_8 = arith.constant 0 : i32
    %9 = arith.cmpi eq, %arg2, %c0_i32_8 : i32
    %10 = arith.extui %9 : i1 to i32
    %c0_i32_9 = arith.constant 0 : i32
    %11 = arith.cmpi ne, %10, %c0_i32_9 : i32
    scf.if %11 {
      %c0_10 = arith.constant 0 : index
      %c0_11 = arith.constant 0 : index
      %12 = vector.load %arg7[%c0_10, %c0_11] : memref<16x128xf32, #tpu.memory_space<vmem>>, vector<16x128xf32>
      %c0_12 = arith.constant 0 : index
      %c0_13 = arith.constant 0 : index
      %13 = vector.load %arg5[%c0_12, %c0_13] : memref<1x128xf32, #tpu.memory_space<vmem>>, vector<1x128xf32>
      %14 = vector.broadcast %13 : vector<1x128xf32> to vector<16x128xf32>
      %15 = arith.addf %12, %14 : vector<16x128xf32>
      %c0_14 = arith.constant 0 : index
      %c0_15 = arith.constant 0 : index
      %16 = vector.load %arg6[%c0_14, %c0_15] : memref<16x128xf32, #tpu.memory_space<vmem>>, vector<16x128xf32>
      tpu.vector_store %arg6[%c0_14, %c0_15], %15 {strides = array<i32>} : memref<16x128xf32, #tpu.memory_space<vmem>>, vector<16x128xf32>,
    } else {
    }
    return
  }
  func.func @transform_0(%arg0: i32, %arg1: i32, %arg2: i32) -> (i32, i32) {
    %c0_i32 = arith.constant 0 : i32
    return %arg0, %arg2 : i32, i32
  }
  func.func @transform_1(%arg0: i32, %arg1: i32, %arg2: i32) -> (i32, i32) {
    %c0_i32 = arith.constant 0 : i32
    return %arg2, %arg1 : i32, i32
  }
  func.func @transform_2(%arg0: i32, %arg1: i32, %arg2: i32) -> (i32, i32) {
    %c0_i32 = arith.constant 0 : i32
    %c0_i32_0 = arith.constant 0 : i32
    return %c0_i32, %arg1 : i32, i32
  }
  func.func @transform_3(%arg0: i32, %arg1: i32, %arg2: i32) -> (i32, i32) {
    %c0_i32 = arith.constant 0 : i32
    return %arg0, %arg1 : i32, i32
  }
}

</mosaic_0001>

<llo_original>
// kernel: tpu_custom_call.1
$region0: #{tpu_custom_call.1}
  #allocation0 [shape = 'u32[]', space=smem, size = 0x4, offset = 0x4, fixed_abs, tag = 'smem constant byte address 0x4 - core index']
  #allocation1 [shape = 'u32[144,128]{1,0:T(1,128)}', space=vmem, size = 0x12000, scoped, tag = 'internal scratch']
  #allocation2 [shape = 'f32[16,128]{1,0:T(8,128)}', space=vmem, size = 0x2000, scoped, tag = 'scratch operand']
  %s0 = inlined_call_operand.hbm [shape: f32[16,128], index: 0, kind: input, shape index: {}]
  %s1 = inlined_call_operand.hbm [shape: f32[128,384], index: 1, kind: input, shape index: {}]
  %s2 = inlined_call_operand.hbm [shape: f32[1,384], index: 2, kind: input, shape index: {}]
  %s3 = inlined_call_operand.hbm [shape: f32[16,384], index: 3, kind: output, shape index: {}]
  %s4 = sld [smem:[#allocation0]]
  $region65: #{tpu_custom_call.1} parent=0
    _
  %s6 = ssub.s32 1, %s4
  %s7 = scalar_select 0, %s6, %s4
  $region1: #{tpu_custom_call.1} parent=0
    #allocation3 [shape = 'u8[8192]{0}', space=vmem, size = 0x2000, scoped, tag = 'input window, operand 0, single buffered']
    #allocation4 [shape = 's32[2]{0}', space=sflag, size = 0x8, scoped, tag = 'scoped memory for tpu_custom_call.1']
    #allocation5 [shape = 's32[2]{0}', space=sflag, size = 0x8, scoped, tag = 'scoped memory for tpu_custom_call.1']
    #allocation6 [shape = 'u8[131072]{0}', space=vmem, size = 0x20000, scoped, tag = 'input window, operand 1']
    #allocation7 [shape = 's32[2]{0}', space=sflag, size = 0x8, scoped, tag = 'scoped memory for tpu_custom_call.1']
    #allocation8 [shape = 'u8[1024]{0}', space=vmem, size = 0x400, scoped, tag = 'input window, operand 2']
    #allocation9 [shape = 'u8[16384]{0}', space=vmem, size = 0x4000, scoped, tag = 'output window, operand 0']
    %8 = vsyncpa [#allocation4], 0
    %9 = vsyncpa [#allocation7], 0
    %s10 = scalar_lea.sflag [#allocation7], 1
    %11 = vsyncpa %s10, 0
    %12 = vsyncpa [#allocation5], 0
    %s13 = scalar_lea.sflag [#allocation5], 1
    %14 = vsyncpa %s13, 0
    loop: start=0, step=1, limit=5
    $region2: #{tpu_custom_call.1} parent=1 // loop_pre_header
      _
    $region3: #{tpu_custom_call.1} parent=1 // loop_header
      %s16 = sphi 0, %s20
      %p17 = scmp.ge.s32.totalorder %s16, 5
      %s23 = sphi 0, %s42
      %s24 = sphi 0, %s38
      %s25 = sphi 0, %s34
      %s26 = sphi 0, %s23
      %s27 = sphi 0, %s24
      %s28 = sphi 0, %s25
      %s29 = sphi 0, %s26
      %s30 = sphi 0, %s27
      %s31 = sphi 0, %s28
      %s47 = sphi 0, %s49
      %s50 = sphi 0, %s47
      %s51 = sphi 0, %s50
      %s67 = sphi 0, %s51
      %s75 = sphi 0, %s77
      %s78 = sphi 0, %s75
      %s79 = sphi 0, %s78
      %s95 = sphi 0, %s79
      %s101 = sphi 0, %s103
      %s104 = sphi 0, %s101
      %s105 = sphi 0, %s104
      %s121 = sphi 0, %s105
      %s129 = sphi 0, %s131
      %s132 = sphi 0, %s129
      %s133 = sphi 0, %s132
      %s149 = sphi 0, %s133
    $region4: #{tpu_custom_call.1} parent=1 // loop_header_branch
      %19 = sbr.rel (%p17) target = $region8
    $region5: #{tpu_custom_call.1} parent=1 // loop_body
      %s21 = ssub.s32 %s16, 1
      %s22 = ssub.s32 %s16, 2
      %s32 = sadd.s32 1, %s25
      %p33 = scmp.ge.s32.totalorder %s32, 1
      %s34 = scalar_select %p33, 0, %s32
      %s35 = sadd.s32 1, %s24
      %s36 = scalar_select %p33, %s35, %s24
      %p37 = scmp.ge.s32.totalorder %s36, 3
      %s38 = scalar_select %p37, 0, %s36
      %s39 = sadd.s32 1, %s23
      %s40 = scalar_select %p37, %s39, %s23
      %p41 = scmp.ge.s32.totalorder %s40, 1
      %s42 = scalar_select %p41, 0, %s40
      %s43 = ssub.s32 %s23, %s42
      %s44 = ssub.s32 %s25, %s34
      %s45 = sor.u32 %s43, %s44
      %p46 = scmp.eq.s32.totalorder %s45, 0
      %s48 = sadd.s32 %s47, 1
      %s49 = scalar_select %p46, %s47, %s48
      %p52 = pneg %p46
      %p53 = scmp.eq.s32.totalorder %s16, 2
      %p54 = por %p52, %p53
      %p55 = scmp.ne.s32.totalorder %s47, %s50
      %p56 = scmp.eq.s32.totalorder %s16, 0
      %p57 = por %p55, %p56
      %p58 = scmp.ne.s32.totalorder %s47, %s50
      %p59 = scmp.eq.s32.totalorder %s21, 2
      %p60 = por %p58, %p59
      %p61 = scmp.ne.s32.totalorder %s50, %s51
      %p62 = scmp.eq.s32.totalorder %s21, 0
      %p63 = por %p61, %p62
      %p64 = scmp.ne.s32.totalorder %s50, %s51
      %p65 = scmp.eq.s32.totalorder %s22, 2
      %p66 = por %p64, %p65
      %p68 = scmp.ne.s32.totalorder %s51, %s67
      %p69 = scmp.eq.s32.totalorder %s22, 0
      %p70 = por %p68, %p69
      %s71 = ssub.s32 %s25, %s34
      %s72 = ssub.s32 %s24, %s38
      %s73 = sor.u32 %s71, %s72
      %p74 = scmp.eq.s32.totalorder %s73, 0
      %s76 = sadd.s32 %s75, 1
      %s77 = scalar_select %p74, %s75, %s76
      %p80 = pneg %p74
      %p81 = scmp.eq.s32.totalorder %s16, 2
      %p82 = por %p80, %p81
      %p83 = scmp.ne.s32.totalorder %s75, %s78
      %p84 = scmp.eq.s32.totalorder %s16, 0
      %p85 = por %p83, %p84
      %p86 = scmp.ne.s32.totalorder %s75, %s78
      %p87 = scmp.eq.s32.totalorder %s21, 2
      %p88 = por %p86, %p87
      %p89 = scmp.ne.s32.totalorder %s78, %s79
      %p90 = scmp.eq.s32.totalorder %s21, 0
      %p91 = por %p89, %p90
      %p92 = scmp.ne.s32.totalorder %s78, %s79
      %p93 = scmp.eq.s32.totalorder %s22, 2
      %p94 = por %p92, %p93
      %p96 = scmp.ne.s32.totalorder %s79, %s95
      %p97 = scmp.eq.s32.totalorder %s22, 0
      %p98 = por %p96, %p97
      %s99 = ssub.s32 %s24, %s38
      %p100 = scmp.eq.s32.totalorder %s99, 0
      %s102 = sadd.s32 %s101, 1
      %s103 = scalar_select %p100, %s101, %s102
      %p106 = pneg %p100
      %p107 = scmp.eq.s32.totalorder %s16, 2
      %p108 = por %p106, %p107
      %p109 = scmp.ne.s32.totalorder %s101, %s104
      %p110 = scmp.eq.s32.totalorder %s16, 0
      %p111 = por %p109, %p110
      %p112 = scmp.ne.s32.totalorder %s101, %s104
      %p113 = scmp.eq.s32.totalorder %s21, 2
      %p114 = por %p112, %p113
      %p115 = scmp.ne.s32.totalorder %s104, %s105
      %p116 = scmp.eq.s32.totalorder %s21, 0
      %p117 = por %p115, %p116
      %p118 = scmp.ne.s32.totalorder %s104, %s105
      %p119 = scmp.eq.s32.totalorder %s22, 2
      %p120 = por %p118, %p119
      %p122 = scmp.ne.s32.totalorder %s105, %s121
      %p123 = scmp.eq.s32.totalorder %s22, 0
      %p124 = por %p122, %p123
      %s125 = ssub.s32 %s23, %s42
      %s126 = ssub.s32 %s24, %s38
      %s127 = sor.u32 %s125, %s126
      %p128 = scmp.eq.s32.totalorder %s127, 0
      %s130 = sadd.s32 %s129, 1
      %s131 = scalar_select %p128, %s129, %s130
      %p134 = pneg %p128
      %p135 = scmp.eq.s32.totalorder %s16, 2
      %p136 = por %p134, %p135
      %p137 = scmp.ne.s32.totalorder %s129, %s132
      %p138 = scmp.eq.s32.totalorder %s16, 0
      %p139 = por %p137, %p138
      %p140 = scmp.ne.s32.totalorder %s129, %s132
      %p141 = scmp.eq.s32.totalorder %s21, 2
      %p142 = por %p140, %p141
      %p143 = scmp.ne.s32.totalorder %s132, %s133
      %p144 = scmp.eq.s32.totalorder %s21, 0
      %p145 = por %p143, %p144
      %p146 = scmp.ne.s32.totalorder %s132, %s133
      %p147 = scmp.eq.s32.totalorder %s22, 2
      %p148 = por %p146, %p147
      %p150 = scmp.ne.s32.totalorder %s133, %s149
      %p151 = scmp.eq.s32.totalorder %s22, 0
      %p152 = por %p150, %p151
      %p153 = scmp.le.s32.totalorder 1, %s16
      %p154 = scmp.lt.s32.totalorder %s16, 4
      %p155 = pnand %p153, %p154
      %p156 = pneg %p155
      // Predicated region
      $region9: #{tpu_custom_call.1} parent=5 // pred_check
        _
      $region10: #{tpu_custom_call.1} parent=5 // pred_check_branch
        %158 = sbr.rel (%p155) target = $region12
      $region11: #{tpu_custom_call.1} parent=5 // pred_region
        %s159 = ssub.s32 %s16, 1
        // Predicated region
        $region13: #{tpu_custom_call.1} parent=11 // pred_check
          %p160 = pneg %p63
        $region14: #{tpu_custom_call.1} parent=11 // pred_check_branch
          %162 = sbr.rel (%p160) target = $region16
        $region15: #{tpu_custom_call.1} parent=11 // pred_region
          %s163 = smul.u32 2, %s26
          %s165 = ssub.s32 256, 256
          %166 = vsyncadd [#allocation4], %s165
          %s167 = sadd.s32 %s28, %s163
          %s168 = smul.addr %s167, 128
          %s169 = scalar_lea.hbm %s0, %s168
          %s170 = sshll.u32 [#allocation3], 4
          %s171 = int_to_ptr.vmem [resolvable:$true] %s170
          %176 = dma.hbm_to_vmem [thread:$0]  %s169, 256, %s171, [#allocation4], 128, 128, 8
        $region16: #{tpu_custom_call.1} parent=11 // pred_fallthru
          _
      $region12: #{tpu_custom_call.1} parent=5 // pred_fallthru
        _
      %p177 = scmp.lt.s32.totalorder %s16, 3
      // Predicated region
      $region17: #{tpu_custom_call.1} parent=5 // pred_check
        %p178 = pneg %p177
      $region18: #{tpu_custom_call.1} parent=5 // pred_check_branch
        %180 = sbr.rel (%p178) target = $region20
      $region19: #{tpu_custom_call.1} parent=5 // pred_region
        // Predicated region
        $region21: #{tpu_custom_call.1} parent=19 // pred_check
          %p181 = pneg %p85
        $region22: #{tpu_custom_call.1} parent=19 // pred_check_branch
          %183 = sbr.rel (%p181) target = $region24
        $region23: #{tpu_custom_call.1} parent=19 // pred_region
          %s184 = sand.u32 %s16, 1
          %s185 = scalar_lea.sflag [#allocation7], %s184
          %s186 = sand.u32 %s75, 1
          %s187 = smul.addr %s186, 128
          %s188 = scalar_lea.vmem [#allocation6], %s187
          %s189 = smul.u32 16, %s25
          %s191 = ssub.s32 2048, 2048
          %192 = vsyncadd %s185, %s191
          %s193 = smul.addr %s189, 3
          %s194 = sadd.s32 %s24, %s193
          %s195 = smul.addr %s194, 128
          %s196 = scalar_lea.hbm %s1, %s195
          %s197 = sshll.u32 %s188, 4
          %s198 = int_to_ptr.vmem [resolvable:$true] %s197
          %203 = dma.hbm_to_vmem [thread:$0]  %s196, 2048, %s198, %s185, 384, 128, 8
        $region24: #{tpu_custom_call.1} parent=19 // pred_fallthru
          _
        // Predicated region
        $region25: #{tpu_custom_call.1} parent=19 // pred_check
          %p204 = pneg %p111
        $region26: #{tpu_custom_call.1} parent=19 // pred_check_branch
          %206 = sbr.rel (%p204) target = $region28
        $region27: #{tpu_custom_call.1} parent=19 // pred_region
          %s207 = sand.u32 %s16, 1
          %s208 = scalar_lea.sflag [#allocation7], %s207
          %s209 = sand.u32 %s101, 1
          %s210 = scalar_lea.vmem [#allocation8], %s209
          %s212 = ssub.s32 16, 16
          %213 = vsyncadd %s208, %s212
          %s214 = smul.addr %s24, 16
          %s215 = scalar_lea.hbm %s2, %s214
          %s217 = sshll.u32 %s210, 4
          %s218 = int_to_ptr.vmem [resolvable:$true] %s217
          %220 = dma.hbm_to_vmem [thread:$0]  %s215, 16, %s218, %s208
        $region28: #{tpu_custom_call.1} parent=19 // pred_fallthru
          _
      $region20: #{tpu_custom_call.1} parent=5 // pred_fallthru
        _
      %p221 = scmp.le.s32.totalorder 1, %s16
      %p222 = scmp.lt.s32.totalorder %s16, 4
      %p223 = pnand %p221, %p222
      %p224 = pneg %p223
      // Predicated region
      $region29: #{tpu_custom_call.1} parent=5 // pred_check
        _
      $region30: #{tpu_custom_call.1} parent=5 // pred_check_branch
        %226 = sbr.rel (%p223) target = $region32
      $region31: #{tpu_custom_call.1} parent=5 // pred_region
        %s227 = ssub.s32 %s16, 1
        // Predicated region
        $region33: #{tpu_custom_call.1} parent=31 // pred_check
          %p228 = pneg %p63
        $region34: #{tpu_custom_call.1} parent=31 // pred_check_branch
          %230 = sbr.rel (%p228) target = $region36
        $region35: #{tpu_custom_call.1} parent=31 // pred_region
          %231 = dma.done [#allocation4], 256
        $region36: #{tpu_custom_call.1} parent=31 // pred_fallthru
          _
        %s232 = sand.u32 %s21, 1
        %s233 = scalar_lea.sflag [#allocation7], %s232
        %s234 = sand.u32 %s78, 1
        %s235 = smul.addr %s234, 128
        %s236 = scalar_lea.vmem [#allocation6], %s235
        // Predicated region
        $region37: #{tpu_custom_call.1} parent=31 // pred_check
          %p237 = pneg %p91
        $region38: #{tpu_custom_call.1} parent=31 // pred_check_branch
          %239 = sbr.rel (%p237) target = $region40
        $region39: #{tpu_custom_call.1} parent=31 // pred_region
          %240 = dma.done %s233, 2048
        $region40: #{tpu_custom_call.1} parent=31 // pred_fallthru
          _
        %s241 = sand.u32 %s21, 1
        %s242 = scalar_lea.sflag [#allocation7], %s241
        %s243 = sand.u32 %s104, 1
        %s244 = scalar_lea.vmem [#allocation8], %s243
        // Predicated region
        $region41: #{tpu_custom_call.1} parent=31 // pred_check
          %p245 = pneg %p117
        $region42: #{tpu_custom_call.1} parent=31 // pred_check_branch
          %247 = sbr.rel (%p245) target = $region44
        $region43: #{tpu_custom_call.1} parent=31 // pred_region
          %248 = dma.done %s242, 16
        $region44: #{tpu_custom_call.1} parent=31 // pred_fallthru
          _
        %p249 = pneg %p63
        %p250 = pneg %p60
        %s251 = sand.u32 %s21, 1
        %s252 = scalar_lea.sflag [#allocation7], %s251
        %s253 = sand.u32 %s78, 1
        %s254 = smul.addr %s253, 128
        %s255 = scalar_lea.vmem [#allocation6], %s254
        %p256 = pneg %p91
        %p257 = pneg %p88
        %s258 = sand.u32 %s21, 1
        %s259 = scalar_lea.sflag [#allocation7], %s258
        %s260 = sand.u32 %s104, 1
        %s261 = scalar_lea.vmem [#allocation8], %s260
        %p262 = pneg %p117
        %p263 = pneg %p114
        %p264 = pneg %p145
        %p265 = pneg %p142
        %s266 = sand.u32 %s132, 1
        %s267 = scalar_lea.sflag [#allocation5], %s266
        %s268 = sand.u32 %s132, 1
        %s269 = smul.addr %s268, 16
        %s270 = scalar_lea.vmem [#allocation9], %s269
        %s271 = smul.u32 2, %s26
        %s272 = smul.u32 16, %s28
        %s273 = smul.u32 2, %s26
        %p274 = scmp.eq.s32.totalorder %s28, 0
        // Predicated region
        $region45: #{tpu_custom_call.1} parent=31 // pred_check
          %p275 = pneg %p274
        $region46: #{tpu_custom_call.1} parent=31 // pred_check_branch
          %277 = sbr.rel (%p275) target = $region48
        $region47: #{tpu_custom_call.1} parent=31 // pred_region
          %278 = vst [vmem:[#allocation2] sm:$0xff] 0.0
          %279 = vst [vmem:[#allocation2 + $0x8] sm:$0xff] 0.0
        $region48: #{tpu_custom_call.1} parent=31 // pred_fallthru
          _
        %v280 = vld [vmem:[#allocation2] sm:$0xff]
        %v281 = vld [vmem:[#allocation2 + $0x8] sm:$0xff]
        %v282 = vld [vmem:[#allocation3] sm:$0xff]
        %v283 = vld [vmem:[#allocation3 + $0x8] sm:$0xff]
        %v284 = vld [vmem:[%s236] sm:$0xff]
        %v285 = vld [vmem:[%s236 + $0x8] sm:$0xff]
        %v286 = vld [vmem:[%s236 + $0x10] sm:$0xff]
        %v287 = vld [vmem:[%s236 + $0x18] sm:$0xff]
        %v288 = vld [vmem:[%s236 + $0x20] sm:$0xff]
        %v289 = vld [vmem:[%s236 + $0x28] sm:$0xff]
        %v290 = vld [vmem:[%s236 + $0x30] sm:$0xff]
        %v291 = vld [vmem:[%s236 + $0x38] sm:$0xff]
        %v292 = vld [vmem:[%s236 + $0x40] sm:$0xff]
        %v293 = vld [vmem:[%s236 + $0x48] sm:$0xff]
        %v294 = vld [vmem:[%s236 + $0x50] sm:$0xff]
        %v295 = vld [vmem:[%s236 + $0x58] sm:$0xff]
        %v296 = vld [vmem:[%s236 + $0x60] sm:$0xff]
        %v297 = vld [vmem:[%s236 + $0x68] sm:$0xff]
        %v298 = vld [vmem:[%s236 + $0x70] sm:$0xff]
        %v299 = vld [vmem:[%s236 + $0x78] sm:$0xff]
        %300 = vmatprep.subr.mxu0 0.0
        %301 = vmatpush1.msra.mxu0 %v284
        %302 = vmatprep.subr.mxu0 0.0
        %303 = vmatpush1.msra.mxu0 %v285
        %304 = vmatprep.subr.mxu0 0.0
        %305 = vmatpush1.msra.mxu0 %v286
        %306 = vmatprep.subr.mxu0 0.0
        %307 = vmatpush1.msra.mxu0 %v287
        %308 = vmatprep.subr.mxu0 0.0
        %309 = vmatpush1.msra.mxu0 %v288
        %310 = vmatprep.subr.mxu0 0.0
        %311 = vmatpush1.msra.mxu0 %v289
        %312 = vmatprep.subr.mxu0 0.0
        %313 = vmatpush1.msra.mxu0 %v290
        %314 = vmatprep.subr.mxu0 0.0
        %315 = vmatpush1.msra.mxu0 %v291
        %316 = vmatprep.subr.mxu0 0.0
        %317 = vmatpush1.msra.mxu0 %v292
        %318 = vmatprep.subr.mxu0 0.0
        %319 = vmatpush1.msra.mxu0 %v293
        %320 = vmatprep.subr.mxu0 0.0
        %321 = vmatpush1.msra.mxu0 %v294
        %322 = vmatprep.subr.mxu0 0.0
        %323 = vmatpush1.msra.mxu0 %v295
        %324 = vmatprep.subr.mxu0 0.0
        %325 = vmatpush1.msra.mxu0 %v296
        %326 = vmatprep.subr.mxu0 0.0
        %327 = vmatpush1.msra.mxu0 %v297
        %328 = vmatprep.subr.mxu0 0.0
        %329 = vmatpush1.msra.mxu0 %v298
        %330 = vmatprep.subr.mxu0 0.0
        %331 = vmatpush1.msra.mxu0 %v299
        %332 = vmatprep.subr.mxu0 0.0
        %333 = vmatpush1.msra.mxu0 0.0
        %334 = vmatprep.subr.mxu0 0.0
        %335 = vmatpush1.msra.mxu0 0.0
        %336 = vmatprep.subr.mxu0 0.0
        %337 = vmatpush1.msra.mxu0 0.0
        %338 = vmatprep.subr.mxu0 0.0
        %339 = vmatpush1.msra.mxu0 0.0
        %340 = vmatprep.subr.mxu0 0.0
        %341 = vmatpush1.msra.mxu0 0.0
        %342 = vmatprep.subr.mxu0 0.0
        %343 = vmatpush1.msra.mxu0 0.0
        %344 = vmatprep.subr.mxu0 0.0
        %345 = vmatpush1.msra.mxu0 0.0
        %346 = vmatprep.subr.mxu0 0.0
        %347 = vmatpush1.msra.mxu0 0.0
        %348 = vmatprep.subr.mxu0 0.0
        %349 = vmatpush1.msra.mxu0 0.0
        %350 = vmatprep.subr.mxu0 0.0
        %351 = vmatpush1.msra.mxu0 0.0
        %352 = vmatprep.subr.mxu0 0.0
        %353 = vmatpush1.msra.mxu0 0.0
        %354 = vmatprep.subr.mxu0 0.0
        %355 = vmatpush1.msra.mxu0 0.0
        %356 = vmatprep.subr.mxu0 0.0
        %357 = vmatpush1.msra.mxu0 0.0
        %358 = vmatprep.subr.mxu0 0.0
        %359 = vmatpush1.msra.mxu0 0.0
        %360 = vmatprep.subr.mxu0 0.0
        %361 = vmatpush1.msra.mxu0 0.0
        %362 = vmatprep.subr.mxu0 0.0
        %363 = vmatpush1.msra.mxu0 0.0
        %364 = vmatprep.mubr.f32.mxu0 0.0
        %365 = vmatmul.mubr.f32.gmra.mrb[0].mxu0 %v282
        %v366 = vpop.f32.mrb[0].mxu0
        %v367 = vadd.f32 0.0, %v366
        %v368 = vpop.f32.mrb[0].mxu0
        %369 = vmatprep.mubr.f32.mxu0 0.0
        %370 = vmatmul.mubr.f32.gmra.mrb[0].mxu0 %v283
        %v371 = vpop.f32.mrb[0].mxu0
        %v372 = vadd.f32 0.0, %v371
        %v373 = vpop.f32.mrb[0].mxu0
        %374 = vdwg.mxu0
        %v375 = vadd.f32 %v280, %v367
        %v376 = vadd.f32 %v281, %v372
        %377 = vst [vmem:[#allocation2] sm:$0xff] %v375
        %378 = vst [vmem:[#allocation2 + $0x8] sm:$0xff] %v376
        // Predicated region
        $region49: #{tpu_custom_call.1} parent=31 // pred_check
          %p379 = pneg %p274
        $region50: #{tpu_custom_call.1} parent=31 // pred_check_branch
          %381 = sbr.rel (%p379) target = $region52
        $region51: #{tpu_custom_call.1} parent=31 // pred_region
          %v382 = vld [vmem:[#allocation2] sm:$0xff]
          %v383 = vld [vmem:[#allocation2 + $0x8] sm:$0xff]
          %v384 = vld [vmem:[%s244] sm:$0x1]
          %v386 = vlaneseq
          %v387 = vshrl.u32 %v386, 7
          %v388 = vsub.s32 0, %v387
          %v389 = vrot.slane %v384, %v388
          %v391 = vadd.f32 %v382, %v389
          %v392 = vadd.f32 %v383, %v389
          %393 = vst [vmem:[%s270] sm:$0xff] %v391
          %394 = vst [vmem:[%s270 + $0x8] sm:$0xff] %v392
        $region52: #{tpu_custom_call.1} parent=31 // pred_fallthru
          _
        %s395 = sand.u32 %s132, 1
        %s396 = scalar_lea.sflag [#allocation5], %s395
        %s397 = sand.u32 %s132, 1
        %s398 = smul.addr %s397, 16
        %s399 = scalar_lea.vmem [#allocation9], %s398
        // Predicated region
        $region53: #{tpu_custom_call.1} parent=31 // pred_check
          %p400 = pneg %p142
        $region54: #{tpu_custom_call.1} parent=31 // pred_check_branch
          %402 = sbr.rel (%p400) target = $region56
        $region55: #{tpu_custom_call.1} parent=31 // pred_region
          %s403 = smul.u32 2, %s26
          %s405 = ssub.s32 256, 256
          %406 = vsyncadd %s396, %s405
          %s407 = smul.addr %s403, 3
          %s408 = sadd.s32 %s27, %s407
          %s409 = smul.addr %s408, 128
          %s410 = scalar_lea.hbm %s3, %s409
          %s411 = sshll.u32 %s399, 4
          %s412 = int_to_ptr.vmem [resolvable:$true] %s411
          %417 = dma.vmem_to_hbm [thread:$0]  %s412, 256, %s410, %s396, 128, 384, 8
        $region56: #{tpu_custom_call.1} parent=31 // pred_fallthru
          _
      $region32: #{tpu_custom_call.1} parent=5 // pred_fallthru
        _
      %p418 = scmp.le.s32.totalorder 2, %s16
      // Predicated region
      $region57: #{tpu_custom_call.1} parent=5 // pred_check
        %p419 = pneg %p418
      $region58: #{tpu_custom_call.1} parent=5 // pred_check_branch
        %421 = sbr.rel (%p419) target = $region60
      $region59: #{tpu_custom_call.1} parent=5 // pred_region
        %s422 = ssub.s32 %s16, 2
        // Predicated region
        $region61: #{tpu_custom_call.1} parent=59 // pred_check
          %p423 = pneg %p148
        $region62: #{tpu_custom_call.1} parent=59 // pred_check_branch
          %425 = sbr.rel (%p423) target = $region64
        $region63: #{tpu_custom_call.1} parent=59 // pred_region
          %s426 = sand.u32 %s133, 1
          %s427 = scalar_lea.sflag [#allocation5], %s426
          %s428 = sand.u32 %s133, 1
          %s429 = smul.addr %s428, 16
          %s430 = scalar_lea.vmem [#allocation9], %s429
          %431 = dma.done %s427, 256
        $region64: #{tpu_custom_call.1} parent=59 // pred_fallthru
          _
      $region60: #{tpu_custom_call.1} parent=5 // pred_fallthru
        _
    $region6: #{tpu_custom_call.1} parent=1 // loop_footer
      %s20 = sadd.s32 1, %s16
    $region7: #{tpu_custom_call.1} parent=1 // loop_footer_branch
      %15 = sbr.rel target = $region3
    $region8: #{tpu_custom_call.1} parent=1 // loop_exit
      _
    %432 = vsyncpa [#allocation4], 1
    %s433 = scalar_lea.sflag [#allocation4], 1
    %434 = vsyncpa %s433, 1
    %435 = vsyncpa [#allocation7], 1
    %s436 = scalar_lea.sflag [#allocation7], 1
    %437 = vsyncpa %s436, 1
    %438 = vsyncpa [#allocation5], 1
    %s439 = scalar_lea.sflag [#allocation5], 1
    %440 = vsyncpa %s439, 1

</llo_original>
